<compile_context>
chip_gen: v7x
topology: tpu7x:2x2x1
jax: 0.10.0
libtpu: 0.0.40
codegen_flags: <defaults>
</compile_context>

<pallas_src>
import jax
import jax.numpy as jnp
from jax.experimental import pallas as pl
from jax.experimental.pallas import tpu as pltpu

# ---- model dims (small, consistent with the module) ----
D_INPUT = 32
LAYERS  = (100, 100)      # WordMLP default layer_sizes
N_WORDS = 50
BATCH   = 16

LANE = 128


def _round_up(n, m):
    return ((n + m - 1) // m) * m


H1_PAD = _round_up(LAYERS[0], LANE)   # 128
H2_PAD = _round_up(LAYERS[1], LANE)   # 128
V_PAD  = _round_up(N_WORDS,  LANE)    # 128


# =====================================================================
# Fused MLP kernel: Linear+ReLU -> Linear+ReLU -> Linear
#   x      : (B, D_INPUT)
#   w1     : (D_INPUT, H1_PAD)
#   w2     : (H1_PAD,  H2_PAD)
#   w_out  : (H2_PAD,  V_PAD)
#   biases : (3, LANE)  rows = [b1, b2, b_out], zero-padded
#   out    : (B, V_PAD) lane-dense, padded lanes are exact zeros
# =====================================================================
def word_mlp_kernel(x_ref, w1_ref, w2_ref, wo_ref, b_ref, out_ref):
    x = x_ref[...]                                                    # (B, Din)

    b1 = b_ref[0:1, :]                                                # (1, 128)
    b2 = b_ref[1:2, :]
    bo = b_ref[2:3, :]

    h1 = jnp.dot(x, w1_ref[...], preferred_element_type=jnp.float32) + b1
    h1 = jnp.maximum(h1, 0.0)                                         # (B, 128)

    h2 = jnp.dot(h1, w2_ref[...], preferred_element_type=jnp.float32) + b2
    h2 = jnp.maximum(h2, 0.0)                                         # (B, 128)

    # lane-dense unmasked store; padded output lanes are exact zeros
    out_ref[...] = (jnp.dot(h2, wo_ref[...], preferred_element_type=jnp.float32)
                    + bo)                                             # (B, 128)


# =====================================================================
# One-time parameter prep: pad to lane-dense shapes, pack biases
# =====================================================================
def prepare_params(params):
    h1, h2 = LAYERS
    w1 = jnp.pad(params["w1"], ((0, 0),            (0, H1_PAD - h1)))
    w2 = jnp.pad(params["w2"], ((0, H1_PAD - h1),  (0, H2_PAD - h2)))
    wo = jnp.pad(params["w_out"], ((0, H2_PAD - h2), (0, V_PAD - N_WORDS)))

    b1 = jnp.pad(params["b1"],    ((0, 0), (0, LANE - h1)))
    b2 = jnp.pad(params["b2"],    ((0, 0), (0, LANE - h2)))
    bo = jnp.pad(params["b_out"], ((0, 0), (0, LANE - N_WORDS)))
    biases = jnp.concatenate([b1, b2, bo], axis=0)                    # (3, 128)

    return {"w1": w1, "w2": w2, "w_out": wo, "biases": biases}


# =====================================================================
# Jitted forward: single dispatch (kernel + slice fused)
# =====================================================================
@jax.jit
def word_mlp_forward(prepped, x):
    B = x.shape[0]
    vmem_spec = pl.BlockSpec(memory_space=pltpu.MemorySpace.VMEM)

    out_padded = pl.pallas_call(
        word_mlp_kernel,
        out_shape=jax.ShapeDtypeStruct((B, V_PAD), jnp.float32),
        in_specs=[vmem_spec] * 5,
        out_specs=vmem_spec,
        compiler_params=pltpu.CompilerParams(vmem_limit_bytes=2 * 1024 * 1024),
    )(x, prepped["w1"], prepped["w2"], prepped["w_out"], prepped["biases"])

    return out_padded[:, :N_WORDS]                                    # (B, n_words)


# =====================================================================
# Parameter init (deterministic, synthetic) — weights stored (in, out)
# =====================================================================
def init_params(key):
    ks = jax.random.split(key, 6)
    w = lambda k, shape, s=0.1: jax.random.normal(k, shape, jnp.float32) * s
    h1, h2 = LAYERS
    return {
        "w1":    w(ks[0], (D_INPUT, h1)),
        "b1":    w(ks[1], (1, h1)),
        "w2":    w(ks[2], (h1, h2)),
        "b2":    w(ks[3], (1, h2)),
        "w_out": w(ks[4], (h2, N_WORDS)),
        "b_out": w(ks[5], (1, N_WORDS)),
    }


if __name__ == "__main__":
    key = jax.random.PRNGKey(0)
    kp, kx = jax.random.split(key, 2)
    params = init_params(kp)
    prepped = jax.tree.map(jax.block_until_ready, prepare_params(params))

    x = jax.random.normal(kx, (BATCH, D_INPUT), jnp.float32)

    out = word_mlp_forward(prepped, x)
    out = jax.block_until_ready(out)

    # reference check in plain JAX (original, unpadded weights)
    ref = jnp.maximum(x @ params["w1"] + params["b1"], 0.0)
    ref = jnp.maximum(ref @ params["w2"] + params["b2"], 0.0)
    ref = ref @ params["w_out"] + params["b_out"]

    assert out.shape == (BATCH, N_WORDS)
    assert bool(jnp.all(jnp.isfinite(out)))
    assert bool(jnp.allclose(out, ref, atol=1e-5, rtol=1e-5))
    print("KERNEL_OK")
</pallas_src>

<mosaic_0001>
module attributes {stable_mosaic.version = 11 : i64} {
  func.func @word_mlp_kernel(%arg0: memref<16x32xf32, #tpu.memory_space<vmem>>, %arg1: memref<32x128xf32, #tpu.memory_space<vmem>>, %arg2: memref<128x128xf32, #tpu.memory_space<vmem>>, %arg3: memref<128x128xf32, #tpu.memory_space<vmem>>, %arg4: memref<3x128xf32, #tpu.memory_space<vmem>>, %arg5: memref<16x128xf32, #tpu.memory_space<vmem>>) attributes {dimension_semantics = [], scalar_prefetch = 0 : i64, scratch_operands = 0 : i64, tpu.core_type = #tpu.core_type<tc>} {
    %c0 = arith.constant 0 : index
    %c0_0 = arith.constant 0 : index
    %0 = vector.load %arg0[%c0, %c0_0] : memref<16x32xf32, #tpu.memory_space<vmem>>, vector<16x32xf32>
    %c0_1 = arith.constant 0 : index
    %c0_2 = arith.constant 0 : index
    %1 = vector.load %arg4[%c0_1, %c0_2] : memref<3x128xf32, #tpu.memory_space<vmem>>, vector<1x128xf32>
    %c1 = arith.constant 1 : index
    %c0_3 = arith.constant 0 : index
    %2 = vector.load %arg4[%c1, %c0_3] : memref<3x128xf32, #tpu.memory_space<vmem>>, vector<1x128xf32>
    %c2 = arith.constant 2 : index
    %c0_4 = arith.constant 0 : index
    %3 = vector.load %arg4[%c2, %c0_4] : memref<3x128xf32, #tpu.memory_space<vmem>>, vector<1x128xf32>
    %c0_5 = arith.constant 0 : index
    %c0_6 = arith.constant 0 : index
    %4 = vector.load %arg1[%c0_5, %c0_6] : memref<32x128xf32, #tpu.memory_space<vmem>>, vector<32x128xf32>
    %cst = arith.constant dense<0.000000e+00> : vector<16x128xf32>
    %5 = tpu.matmul %0, %4, %cst {dimension_numbers = #tpu.dot_dimension_numbers<[1], [0], [0], [1], [0, 0, 1, 1], [], []>} : vector<16x32xf32>, vector<32x128xf32>, vector<16x128xf32> -> vector<16x128xf32>
    %6 = vector.broadcast %1 : vector<1x128xf32> to vector<16x128xf32>
    %7 = arith.addf %5, %6 : vector<16x128xf32>
    %cst_7 = arith.constant 0.000000e+00 : f32
    %8 = vector.broadcast %cst_7 : f32 to vector<16x128xf32>
    %9 = arith.maximumf %7, %8 : vector<16x128xf32>
    %c0_8 = arith.constant 0 : index
    %c0_9 = arith.constant 0 : index
    %10 = vector.load %arg2[%c0_8, %c0_9] : memref<128x128xf32, #tpu.memory_space<vmem>>, vector<128x128xf32>
    %cst_10 = arith.constant dense<0.000000e+00> : vector<16x128xf32>
    %11 = tpu.matmul %9, %10, %cst_10 {dimension_numbers = #tpu.dot_dimension_numbers<[1], [0], [0], [1], [0, 0, 1, 1], [], []>} : vector<16x128xf32>, vector<128x128xf32>, vector<16x128xf32> -> vector<16x128xf32>
    %12 = vector.broadcast %2 : vector<1x128xf32> to vector<16x128xf32>
    %13 = arith.addf %11, %12 : vector<16x128xf32>
    %cst_11 = arith.constant 0.000000e+00 : f32
    %14 = vector.broadcast %cst_11 : f32 to vector<16x128xf32>
    %15 = arith.maximumf %13, %14 : vector<16x128xf32>
    %c0_12 = arith.constant 0 : index
    %c0_13 = arith.constant 0 : index
    %16 = vector.load %arg3[%c0_12, %c0_13] : memref<128x128xf32, #tpu.memory_space<vmem>>, vector<128x128xf32>
    %cst_14 = arith.constant dense<0.000000e+00> : vector<16x128xf32>
    %17 = tpu.matmul %15, %16, %cst_14 {dimension_numbers = #tpu.dot_dimension_numbers<[1], [0], [0], [1], [0, 0, 1, 1], [], []>} : vector<16x128xf32>, vector<128x128xf32>, vector<16x128xf32> -> vector<16x128xf32>
    %18 = vector.broadcast %3 : vector<1x128xf32> to vector<16x128xf32>
    %19 = arith.addf %17, %18 : vector<16x128xf32>
    %c0_15 = arith.constant 0 : index
    %c0_16 = arith.constant 0 : index
    %20 = vector.load %arg5[%c0_15, %c0_16] : memref<16x128xf32, #tpu.memory_space<vmem>>, vector<16x128xf32>
    tpu.vector_store %arg5[%c0_15, %c0_16], %19 {strides = array<i32>} : memref<16x128xf32, #tpu.memory_space<vmem>>, vector<16x128xf32>,
    return
  }
}

</mosaic_0001>

<llo_original>
// kernel: word_mlp_forward.1
$region0: #{word_mlp_forward.1}
  #allocation0 [shape = 'u32[]', space=smem, size = 0x4, offset = 0x4, fixed_abs, tag = 'smem constant byte address 0x4 - core index']
  #allocation1 [shape = 'u32[144,128]{1,0:T(1,128)}', space=vmem, size = 0x12000, scoped, tag = 'internal scratch']
  %s0 = inlined_call_operand.hbm [shape: f32[16,32], index: 0, kind: input, shape index: {}]
  %s1 = inlined_call_operand.hbm [shape: f32[32,128], index: 1, kind: input, shape index: {}]
  %s2 = inlined_call_operand.hbm [shape: f32[128,128], index: 2, kind: input, shape index: {}]
  %s3 = inlined_call_operand.hbm [shape: f32[128,128], index: 3, kind: input, shape index: {}]
  %s4 = inlined_call_operand.hbm [shape: f32[3,128], index: 4, kind: input, shape index: {}]
  %s5 = inlined_call_operand.hbm [shape: f32[16,128], index: 5, kind: output, shape index: {}]
  %s6 = sld [smem:[#allocation0]]
  $region50: #{word_mlp_forward.1} parent=0
    _
  %s8 = ssub.s32 1, %s6
  %s9 = scalar_select 0, %s8, %s6
  $region1: #{word_mlp_forward.1} parent=0
    #allocation2 [shape = 'u8[8192]{0}', space=vmem, size = 0x2000, scoped, tag = 'input window, operand 0, single buffered']
    #allocation3 [shape = 's32[1]{0}', space=sflag, size = 0x4, scoped, tag = 'scoped memory for word_mlp_forward.1']
    #allocation4 [shape = 's32[1]{0}', space=sflag, size = 0x4, scoped, tag = 'scoped memory for word_mlp_forward.1']
    #allocation5 [shape = 'u8[16384]{0}', space=vmem, size = 0x4000, scoped, tag = 'input window, operand 1, single buffered']
    #allocation6 [shape = 's32[1]{0}', space=sflag, size = 0x4, scoped, tag = 'scoped memory for word_mlp_forward.1']
    #allocation7 [shape = 'u8[65536]{0}', space=vmem, size = 0x10000, scoped, tag = 'input window, operand 2, single buffered']
    #allocation8 [shape = 'u8[65536]{0}', space=vmem, size = 0x10000, scoped, tag = 'input window, operand 3, single buffered']
    #allocation9 [shape = 's32[1]{0}', space=sflag, size = 0x4, scoped, tag = 'scoped memory for word_mlp_forward.1']
    #allocation10 [shape = 'u8[2048]{0}', space=vmem, size = 0x800, scoped, tag = 'input window, operand 4, single buffered']
    #allocation11 [shape = 'u8[8192]{0}', space=vmem, size = 0x2000, scoped, tag = 'output window, operand 0, single buffered']
    %10 = vsyncpa [#allocation3], 0
    %11 = vsyncpa [#allocation6], 0
    %12 = vsyncpa [#allocation9], 0
    %13 = vsyncpa [#allocation4], 0
    // Predicated region
    $region2: #{word_mlp_forward.1} parent=1 // pred_check
      _
    $region3: #{word_mlp_forward.1} parent=1 // pred_check_branch
      %15 = sbr.rel (0) target = $region5
    $region4: #{word_mlp_forward.1} parent=1 // pred_region
      %s17 = ssub.s32 256, 256
      %18 = vsyncadd [#allocation3], %s17
      %s19 = sshll.u32 [#allocation2], 4
      %s20 = int_to_ptr.vmem [resolvable:$true] %s19
      %25 = dma.hbm_to_vmem [thread:$0]  %s0, 256, %s20, [#allocation3], 128, 128, 8
    $region5: #{word_mlp_forward.1} parent=1 // pred_fallthru
      _
    // Predicated region
    $region6: #{word_mlp_forward.1} parent=1 // pred_check
      _
    $region7: #{word_mlp_forward.1} parent=1 // pred_check_branch
      %27 = sbr.rel (0) target = $region9
    $region8: #{word_mlp_forward.1} parent=1 // pred_region
      %s29 = ssub.s32 512, 512
      %30 = vsyncadd [#allocation6], %s29
      %s31 = sshll.u32 [#allocation5], 4
      %s32 = int_to_ptr.vmem [resolvable:$true] %s31
      %37 = dma.hbm_to_vmem [thread:$0]  %s1, 512, %s32, [#allocation6], 128, 128, 8
    $region9: #{word_mlp_forward.1} parent=1 // pred_fallthru
      _
    // Predicated region
    $region10: #{word_mlp_forward.1} parent=1 // pred_check
      _
    $region11: #{word_mlp_forward.1} parent=1 // pred_check_branch
      %39 = sbr.rel (0) target = $region13
    $region12: #{word_mlp_forward.1} parent=1 // pred_region
      %s41 = ssub.s32 2048, 2048
      %42 = vsyncadd [#allocation6], %s41
      %s43 = sshll.u32 [#allocation7], 4
      %s44 = int_to_ptr.vmem [resolvable:$true] %s43
      %49 = dma.hbm_to_vmem [thread:$0]  %s2, 2048, %s44, [#allocation6], 128, 128, 8
    $region13: #{word_mlp_forward.1} parent=1 // pred_fallthru
      _
    // Predicated region
    $region14: #{word_mlp_forward.1} parent=1 // pred_check
      _
    $region15: #{word_mlp_forward.1} parent=1 // pred_check_branch
      %51 = sbr.rel (0) target = $region17
    $region16: #{word_mlp_forward.1} parent=1 // pred_region
      %s53 = ssub.s32 2048, 2048
      %54 = vsyncadd [#allocation9], %s53
      %s55 = sshll.u32 [#allocation8], 4
      %s56 = int_to_ptr.vmem [resolvable:$true] %s55
      %61 = dma.hbm_to_vmem [thread:$0]  %s3, 2048, %s56, [#allocation9], 128, 128, 8
    $region17: #{word_mlp_forward.1} parent=1 // pred_fallthru
      _
    // Predicated region
    $region18: #{word_mlp_forward.1} parent=1 // pred_check
      _
    $region19: #{word_mlp_forward.1} parent=1 // pred_check_branch
      %63 = sbr.rel (0) target = $region21
    $region20: #{word_mlp_forward.1} parent=1 // pred_region
      %s65 = ssub.s32 64, 64
      %66 = vsyncadd [#allocation9], %s65
      %s68 = sshll.u32 [#allocation10], 4
      %s69 = int_to_ptr.vmem [resolvable:$true] %s68
      %71 = dma.hbm_to_vmem [thread:$0]  %s4, 64, %s69, [#allocation9]
    $region21: #{word_mlp_forward.1} parent=1 // pred_fallthru
      _
    // Predicated region
    $region22: #{word_mlp_forward.1} parent=1 // pred_check
      _
    $region23: #{word_mlp_forward.1} parent=1 // pred_check_branch
      %73 = sbr.rel (0) target = $region25
    $region24: #{word_mlp_forward.1} parent=1 // pred_region
      %74 = dma.done [#allocation3], 256
    $region25: #{word_mlp_forward.1} parent=1 // pred_fallthru
      _
    // Predicated region
    $region26: #{word_mlp_forward.1} parent=1 // pred_check
      _
    $region27: #{word_mlp_forward.1} parent=1 // pred_check_branch
      %76 = sbr.rel (0) target = $region29
    $region28: #{word_mlp_forward.1} parent=1 // pred_region
      %77 = dma.done [#allocation6], 512
    $region29: #{word_mlp_forward.1} parent=1 // pred_fallthru
      _
    // Predicated region
    $region30: #{word_mlp_forward.1} parent=1 // pred_check
      _
    $region31: #{word_mlp_forward.1} parent=1 // pred_check_branch
      %79 = sbr.rel (0) target = $region33
    $region32: #{word_mlp_forward.1} parent=1 // pred_region
      %80 = dma.done [#allocation6], 2048
    $region33: #{word_mlp_forward.1} parent=1 // pred_fallthru
      _
    // Predicated region
    $region34: #{word_mlp_forward.1} parent=1 // pred_check
      _
    $region35: #{word_mlp_forward.1} parent=1 // pred_check_branch
      %82 = sbr.rel (0) target = $region37
    $region36: #{word_mlp_forward.1} parent=1 // pred_region
      %83 = dma.done [#allocation9], 2048
    $region37: #{word_mlp_forward.1} parent=1 // pred_fallthru
      _
    // Predicated region
    $region38: #{word_mlp_forward.1} parent=1 // pred_check
      _
    $region39: #{word_mlp_forward.1} parent=1 // pred_check_branch
      %85 = sbr.rel (0) target = $region41
    $region40: #{word_mlp_forward.1} parent=1 // pred_region
      %86 = dma.done [#allocation9], 64
    $region41: #{word_mlp_forward.1} parent=1 // pred_fallthru
      _
    %v87 = vld [vmem:[#allocation2] sm:$0xff]
    %v88 = vld [vmem:[#allocation2 + $0x8] sm:$0xff]
    %v89 = vld [vmem:[#allocation10] sm:$0x1]
    %v90 = vld [vmem:[#allocation10 + $0x1] sm:$0x1]
    %v91 = vld [vmem:[#allocation10 + $0x2] sm:$0x1]
    %v92 = vld [vmem:[#allocation5] sm:$0xff]
    %v93 = vld [vmem:[#allocation5 + $0x8] sm:$0xff]
    %v94 = vld [vmem:[#allocation5 + $0x10] sm:$0xff]
    %v95 = vld [vmem:[#allocation5 + $0x18] sm:$0xff]
    %v96 = vlaneseq
    %v97 = vshrl.u32 %v96, 7
    %v98 = vsub.s32 0, %v97
    %v99 = vrot.slane %v89, %v98
    %vm100 = vcmask 261120
    %v102 = vsel %vm100, %v87, 0
    %v105 = vsel %vm100, %v88, 0
    %107 = vmatprep.subr.mxu0 0.0
    %108 = vmatpush1.msra.mxu0 %v92
    %109 = vmatprep.subr.mxu0 0.0
    %110 = vmatpush1.msra.mxu0 %v93
    %111 = vmatprep.subr.mxu0 0.0
    %112 = vmatpush1.msra.mxu0 %v94
    %113 = vmatprep.subr.mxu0 0.0
    %114 = vmatpush1.msra.mxu0 %v95
    %115 = vmatprep.subr.mxu0 0.0
    %116 = vmatpush1.msra.mxu0 0.0
    %117 = vmatprep.subr.mxu0 0.0
    %118 = vmatpush1.msra.mxu0 0.0
    %119 = vmatprep.subr.mxu0 0.0
    %120 = vmatpush1.msra.mxu0 0.0
    %121 = vmatprep.subr.mxu0 0.0
    %122 = vmatpush1.msra.mxu0 0.0
    %123 = vmatprep.subr.mxu0 0.0
    %124 = vmatpush1.msra.mxu0 0.0
    %125 = vmatprep.subr.mxu0 0.0
    %126 = vmatpush1.msra.mxu0 0.0
    %127 = vmatprep.subr.mxu0 0.0
    %128 = vmatpush1.msra.mxu0 0.0
    %129 = vmatprep.subr.mxu0 0.0
    %130 = vmatpush1.msra.mxu0 0.0
    %131 = vmatprep.subr.mxu0 0.0
    %132 = vmatpush1.msra.mxu0 0.0
    %133 = vmatprep.subr.mxu0 0.0
    %134 = vmatpush1.msra.mxu0 0.0
    %135 = vmatprep.subr.mxu0 0.0
    %136 = vmatpush1.msra.mxu0 0.0
    %137 = vmatprep.subr.mxu0 0.0
    %138 = vmatpush1.msra.mxu0 0.0
    %139 = vmatprep.subr.mxu0 0.0
    %140 = vmatpush1.msra.mxu0 0.0
    %141 = vmatprep.subr.mxu0 0.0
    %142 = vmatpush1.msra.mxu0 0.0
    %143 = vmatprep.subr.mxu0 0.0
    %144 = vmatpush1.msra.mxu0 0.0
    %145 = vmatprep.subr.mxu0 0.0
    %146 = vmatpush1.msra.mxu0 0.0
    %147 = vmatprep.subr.mxu0 0.0
    %148 = vmatpush1.msra.mxu0 0.0
    %149 = vmatprep.subr.mxu0 0.0
    %150 = vmatpush1.msra.mxu0 0.0
    %151 = vmatprep.subr.mxu0 0.0
    %152 = vmatpush1.msra.mxu0 0.0
    %153 = vmatprep.subr.mxu0 0.0
    %154 = vmatpush1.msra.mxu0 0.0
    %155 = vmatprep.subr.mxu0 0.0
    %156 = vmatpush1.msra.mxu0 0.0
    %157 = vmatprep.subr.mxu0 0.0
    %158 = vmatpush1.msra.mxu0 0.0
    %159 = vmatprep.subr.mxu0 0.0
    %160 = vmatpush1.msra.mxu0 0.0
    %161 = vmatprep.subr.mxu0 0.0
    %162 = vmatpush1.msra.mxu0 0.0
    %163 = vmatprep.subr.mxu0 0.0
    %164 = vmatpush1.msra.mxu0 0.0
    %165 = vmatprep.subr.mxu0 0.0
    %166 = vmatpush1.msra.mxu0 0.0
    %167 = vmatprep.subr.mxu0 0.0
    %168 = vmatpush1.msra.mxu0 0.0
    %169 = vmatprep.subr.mxu0 0.0
    %170 = vmatpush1.msra.mxu0 0.0
    %171 = vmatprep.mubr.f32.mxu0 0.0
    %172 = vmatmul.mubr.f32.gmra.mrb[0].mxu0 %v102
    %v173 = vpop.f32.mrb[0].mxu0
    %v174 = vadd.f32 %v99, %v173
    %v175 = vpop.f32.mrb[0].mxu0
    %176 = vmatprep.mubr.f32.mxu0 0.0
    %177 = vmatmul.mubr.f32.gmra.mrb[0].mxu0 %v105
    %v178 = vpop.f32.mrb[0].mxu0
    %v179 = vadd.f32 %v99, %v178
    %v180 = vpop.f32.mrb[0].mxu0
    %181 = vdwg.mxu0
    %v182 = vmax.f32 %v174, 0.0
    %v183 = vmax.f32 %v179, 0.0
    %v184 = vld [vmem:[#allocation7] sm:$0xff]
    %v185 = vld [vmem:[#allocation7 + $0x8] sm:$0xff]
    %v186 = vld [vmem:[#allocation7 + $0x10] sm:$0xff]
    %v187 = vld [vmem:[#allocation7 + $0x18] sm:$0xff]
    %v188 = vld [vmem:[#allocation7 + $0x20] sm:$0xff]
    %v189 = vld [vmem:[#allocation7 + $0x28] sm:$0xff]
    %v190 = vld [vmem:[#allocation7 + $0x30] sm:$0xff]
    %v191 = vld [vmem:[#allocation7 + $0x38] sm:$0xff]
    %v192 = vld [vmem:[#allocation7 + $0x40] sm:$0xff]
    %v193 = vld [vmem:[#allocation7 + $0x48] sm:$0xff]
    %v194 = vld [vmem:[#allocation7 + $0x50] sm:$0xff]
    %v195 = vld [vmem:[#allocation7 + $0x58] sm:$0xff]
    %v196 = vld [vmem:[#allocation7 + $0x60] sm:$0xff]
    %v197 = vld [vmem:[#allocation7 + $0x68] sm:$0xff]
    %v198 = vld [vmem:[#allocation7 + $0x70] sm:$0xff]
    %v199 = vld [vmem:[#allocation7 + $0x78] sm:$0xff]
    %v200 = vlaneseq
    %v201 = vshrl.u32 %v200, 7
    %v202 = vsub.s32 0, %v201
    %v203 = vrot.slane %v90, %v202
    %204 = vmatprep.subr.mxu0 0.0
    %205 = vmatpush1.msra.mxu0 %v184
    %206 = vmatprep.subr.mxu0 0.0
    %207 = vmatpush1.msra.mxu0 %v185
    %208 = vmatprep.subr.mxu0 0.0
    %209 = vmatpush1.msra.mxu0 %v186
    %210 = vmatprep.subr.mxu0 0.0
    %211 = vmatpush1.msra.mxu0 %v187
    %212 = vmatprep.subr.mxu0 0.0
    %213 = vmatpush1.msra.mxu0 %v188
    %214 = vmatprep.subr.mxu0 0.0
    %215 = vmatpush1.msra.mxu0 %v189
    %216 = vmatprep.subr.mxu0 0.0
    %217 = vmatpush1.msra.mxu0 %v190
    %218 = vmatprep.subr.mxu0 0.0
    %219 = vmatpush1.msra.mxu0 %v191
    %220 = vmatprep.subr.mxu0 0.0
    %221 = vmatpush1.msra.mxu0 %v192
    %222 = vmatprep.subr.mxu0 0.0
    %223 = vmatpush1.msra.mxu0 %v193
    %224 = vmatprep.subr.mxu0 0.0
    %225 = vmatpush1.msra.mxu0 %v194
    %226 = vmatprep.subr.mxu0 0.0
    %227 = vmatpush1.msra.mxu0 %v195
    %228 = vmatprep.subr.mxu0 0.0
    %229 = vmatpush1.msra.mxu0 %v196
    %230 = vmatprep.subr.mxu0 0.0
    %231 = vmatpush1.msra.mxu0 %v197
    %232 = vmatprep.subr.mxu0 0.0
    %233 = vmatpush1.msra.mxu0 %v198
    %234 = vmatprep.subr.mxu0 0.0
    %235 = vmatpush1.msra.mxu0 %v199
    %236 = vmatprep.subr.mxu0 0.0
    %237 = vmatpush1.msra.mxu0 0.0
    %238 = vmatprep.subr.mxu0 0.0
    %239 = vmatpush1.msra.mxu0 0.0
    %240 = vmatprep.subr.mxu0 0.0
    %241 = vmatpush1.msra.mxu0 0.0
    %242 = vmatprep.subr.mxu0 0.0
    %243 = vmatpush1.msra.mxu0 0.0
    %244 = vmatprep.subr.mxu0 0.0
    %245 = vmatpush1.msra.mxu0 0.0
    %246 = vmatprep.subr.mxu0 0.0
    %247 = vmatpush1.msra.mxu0 0.0
    %248 = vmatprep.subr.mxu0 0.0
    %249 = vmatpush1.msra.mxu0 0.0
    %250 = vmatprep.subr.mxu0 0.0
    %251 = vmatpush1.msra.mxu0 0.0
    %252 = vmatprep.subr.mxu0 0.0
    %253 = vmatpush1.msra.mxu0 0.0
    %254 = vmatprep.subr.mxu0 0.0
    %255 = vmatpush1.msra.mxu0 0.0
    %256 = vmatprep.subr.mxu0 0.0
    %257 = vmatpush1.msra.mxu0 0.0
    %258 = vmatprep.subr.mxu0 0.0
    %259 = vmatpush1.msra.mxu0 0.0
    %260 = vmatprep.subr.mxu0 0.0
    %261 = vmatpush1.msra.mxu0 0.0
    %262 = vmatprep.subr.mxu0 0.0
    %263 = vmatpush1.msra.mxu0 0.0
    %264 = vmatprep.subr.mxu0 0.0
    %265 = vmatpush1.msra.mxu0 0.0
    %266 = vmatprep.subr.mxu0 0.0
    %267 = vmatpush1.msra.mxu0 0.0
    %268 = vmatprep.mubr.f32.mxu0 0.0
    %269 = vmatmul.mubr.f32.gmra.mrb[0].mxu0 %v182
    %v270 = vpop.f32.mrb[0].mxu0
    %v271 = vadd.f32 %v203, %v270
    %v272 = vpop.f32.mrb[0].mxu0
    %273 = vmatprep.mubr.f32.mxu0 0.0
    %274 = vmatmul.mubr.f32.gmra.mrb[0].mxu0 %v183
    %v275 = vpop.f32.mrb[0].mxu0
    %v276 = vadd.f32 %v203, %v275
    %v277 = vpop.f32.mrb[0].mxu0
    %278 = vdwg.mxu0
    %v279 = vmax.f32 %v271, 0.0
    %v280 = vmax.f32 %v276, 0.0
    %v281 = vld [vmem:[#allocation8] sm:$0xff]
    %v282 = vld [vmem:[#allocation8 + $0x8] sm:$0xff]
    %v283 = vld [vmem:[#allocation8 + $0x10] sm:$0xff]
    %v284 = vld [vmem:[#allocation8 + $0x18] sm:$0xff]
    %v285 = vld [vmem:[#allocation8 + $0x20] sm:$0xff]
    %v286 = vld [vmem:[#allocation8 + $0x28] sm:$0xff]
    %v287 = vld [vmem:[#allocation8 + $0x30] sm:$0xff]
    %v288 = vld [vmem:[#allocation8 + $0x38] sm:$0xff]
    %v289 = vld [vmem:[#allocation8 + $0x40] sm:$0xff]
    %v290 = vld [vmem:[#allocation8 + $0x48] sm:$0xff]
    %v291 = vld [vmem:[#allocation8 + $0x50] sm:$0xff]
    %v292 = vld [vmem:[#allocation8 + $0x58] sm:$0xff]
    %v293 = vld [vmem:[#allocation8 + $0x60] sm:$0xff]
    %v294 = vld [vmem:[#allocation8 + $0x68] sm:$0xff]
    %v295 = vld [vmem:[#allocation8 + $0x70] sm:$0xff]
    %v296 = vld [vmem:[#allocation8 + $0x78] sm:$0xff]
    %v297 = vlaneseq
    %v298 = vshrl.u32 %v297, 7
    %v299 = vsub.s32 0, %v298
    %v300 = vrot.slane %v91, %v299
    %301 = vmatprep.subr.mxu0 0.0
    %302 = vmatpush1.msra.mxu0 %v281
    %303 = vmatprep.subr.mxu0 0.0
    %304 = vmatpush1.msra.mxu0 %v282
    %305 = vmatprep.subr.mxu0 0.0
    %306 = vmatpush1.msra.mxu0 %v283
    %307 = vmatprep.subr.mxu0 0.0
    %308 = vmatpush1.msra.mxu0 %v284
    %309 = vmatprep.subr.mxu0 0.0
    %310 = vmatpush1.msra.mxu0 %v285
    %311 = vmatprep.subr.mxu0 0.0
    %312 = vmatpush1.msra.mxu0 %v286
    %313 = vmatprep.subr.mxu0 0.0
    %314 = vmatpush1.msra.mxu0 %v287
    %315 = vmatprep.subr.mxu0 0.0
    %316 = vmatpush1.msra.mxu0 %v288
    %317 = vmatprep.subr.mxu0 0.0
    %318 = vmatpush1.msra.mxu0 %v289
    %319 = vmatprep.subr.mxu0 0.0
    %320 = vmatpush1.msra.mxu0 %v290
    %321 = vmatprep.subr.mxu0 0.0
    %322 = vmatpush1.msra.mxu0 %v291
    %323 = vmatprep.subr.mxu0 0.0
    %324 = vmatpush1.msra.mxu0 %v292
    %325 = vmatprep.subr.mxu0 0.0
    %326 = vmatpush1.msra.mxu0 %v293
    %327 = vmatprep.subr.mxu0 0.0
    %328 = vmatpush1.msra.mxu0 %v294
    %329 = vmatprep.subr.mxu0 0.0
    %330 = vmatpush1.msra.mxu0 %v295
    %331 = vmatprep.subr.mxu0 0.0
    %332 = vmatpush1.msra.mxu0 %v296
    %333 = vmatprep.subr.mxu0 0.0
    %334 = vmatpush1.msra.mxu0 0.0
    %335 = vmatprep.subr.mxu0 0.0
    %336 = vmatpush1.msra.mxu0 0.0
    %337 = vmatprep.subr.mxu0 0.0
    %338 = vmatpush1.msra.mxu0 0.0
    %339 = vmatprep.subr.mxu0 0.0
    %340 = vmatpush1.msra.mxu0 0.0
    %341 = vmatprep.subr.mxu0 0.0
    %342 = vmatpush1.msra.mxu0 0.0
    %343 = vmatprep.subr.mxu0 0.0
    %344 = vmatpush1.msra.mxu0 0.0
    %345 = vmatprep.subr.mxu0 0.0
    %346 = vmatpush1.msra.mxu0 0.0
    %347 = vmatprep.subr.mxu0 0.0
    %348 = vmatpush1.msra.mxu0 0.0
    %349 = vmatprep.subr.mxu0 0.0
    %350 = vmatpush1.msra.mxu0 0.0
    %351 = vmatprep.subr.mxu0 0.0
    %352 = vmatpush1.msra.mxu0 0.0
    %353 = vmatprep.subr.mxu0 0.0
    %354 = vmatpush1.msra.mxu0 0.0
    %355 = vmatprep.subr.mxu0 0.0
    %356 = vmatpush1.msra.mxu0 0.0
    %357 = vmatprep.subr.mxu0 0.0
    %358 = vmatpush1.msra.mxu0 0.0
    %359 = vmatprep.subr.mxu0 0.0
    %360 = vmatpush1.msra.mxu0 0.0
    %361 = vmatprep.subr.mxu0 0.0
    %362 = vmatpush1.msra.mxu0 0.0
    %363 = vmatprep.subr.mxu0 0.0
    %364 = vmatpush1.msra.mxu0 0.0
    %365 = vmatprep.mubr.f32.mxu0 0.0
    %366 = vmatmul.mubr.f32.gmra.mrb[0].mxu0 %v279
    %v367 = vpop.f32.mrb[0].mxu0
    %v368 = vadd.f32 %v300, %v367
    %v369 = vpop.f32.mrb[0].mxu0
    %370 = vmatprep.mubr.f32.mxu0 0.0
    %371 = vmatmul.mubr.f32.gmra.mrb[0].mxu0 %v280
    %v372 = vpop.f32.mrb[0].mxu0
    %v373 = vadd.f32 %v300, %v372
    %v374 = vpop.f32.mrb[0].mxu0
    %375 = vdwg.mxu0
    %376 = vst [vmem:[#allocation11] sm:$0xff] %v368
    %377 = vst [vmem:[#allocation11 + $0x8] sm:$0xff] %v373
    // Predicated region
    $region42: #{word_mlp_forward.1} parent=1 // pred_check
      _
    $region43: #{word_mlp_forward.1} parent=1 // pred_check_branch
      %379 = sbr.rel (0) target = $region45
    $region44: #{word_mlp_forward.1} parent=1 // pred_region
      %s381 = ssub.s32 256, 256
      %382 = vsyncadd [#allocation4], %s381
      %s383 = sshll.u32 [#allocation11], 4
      %s384 = int_to_ptr.vmem [resolvable:$true] %s383
      %389 = dma.vmem_to_hbm [thread:$0]  %s384, 256, %s5, [#allocation4], 128, 128, 8
    $region45: #{word_mlp_forward.1} parent=1 // pred_fallthru
      _
    // Predicated region
    $region46: #{word_mlp_forward.1} parent=1 // pred_check
      _
    $region47: #{word_mlp_forward.1} parent=1 // pred_check_branch
      %391 = sbr.rel (0) target = $region49
    $region48: #{word_mlp_forward.1} parent=1 // pred_region
      %392 = dma.done [#allocation4], 256
    $region49: #{word_mlp_forward.1} parent=1 // pred_fallthru
      _
    %393 = vsyncpa [#allocation3], 1
    %394 = vsyncpa [#allocation6], 1
    %395 = vsyncpa [#allocation9], 1
    %396 = vsyncpa [#allocation4], 1

</llo_original>
